<compile_context>
chip_gen: v5e
topology: v5e:2x2
jax: 0.10.0
libtpu: 0.0.40
codegen_flags: <defaults>
</compile_context>

<pallas_src>
import jax
import jax.numpy as jnp
from jax.experimental import pallas as pl
from jax.experimental.pallas import tpu as pltpu


def _reduce_state_kernel(h_ref, c_ref, wth_ref, bh_ref, wtc_ref, bc_ref, o_ref):
    # h_ref, c_ref : (2, B, H)
    # wth_ref, wtc_ref : (2, H, H)   -- W^T split along the contraction dim
    # bh_ref, bc_ref   : (1, H)
    # o_ref            : (B, 2H)     -- [reduced_h | reduced_c]
    acc_h = jnp.dot(h_ref[0], wth_ref[0], preferred_element_type=jnp.float32)
    acc_h = acc_h + jnp.dot(h_ref[1], wth_ref[1], preferred_element_type=jnp.float32)
    acc_h = jnp.maximum(acc_h + bh_ref[...], 0.0)

    acc_c = jnp.dot(c_ref[0], wtc_ref[0], preferred_element_type=jnp.float32)
    acc_c = acc_c + jnp.dot(c_ref[1], wtc_ref[1], preferred_element_type=jnp.float32)
    acc_c = jnp.maximum(acc_c + bc_ref[...], 0.0)

    o_ref[...] = jnp.concatenate([acc_h, acc_c], axis=-1).astype(o_ref.dtype)


def _reduce_state_fused(h, c, wt_h, b_h, wt_c, b_c):
    """Fused bi-LSTM state reduction.

    h, c        : (2, B, H) float32
    wt_h, wt_c  : (2, H, H) float32  (W^T reshaped, precomputed)
    b_h, b_c    : (1, H) float32
    returns     : (B, 2H) float32 slab  [relu(lin_h) | relu(lin_c)]
    """
    _, B, H = h.shape
    flops = 4 * B * (2 * H) * H                      # two (B,2H)x(2H,H) matmuls
    bytes_accessed = 4 * (2 * 2 * B * H              # h, c in
                          + 2 * 2 * H * H            # both weights
                          + 2 * H                    # both biases
                          + B * 2 * H)               # output slab
    vmem_spec = pl.BlockSpec(memory_space=pltpu.MemorySpace.VMEM)

    return pl.pallas_call(
        _reduce_state_kernel,
        out_shape=jax.ShapeDtypeStruct((B, 2 * H), h.dtype),
        in_specs=[vmem_spec] * 6,
        out_specs=vmem_spec,
        cost_estimate=pl.CostEstimate(
            flops=flops, transcendentals=0, bytes_accessed=bytes_accessed),
    )(h, c, wt_h, b_h, wt_c, b_c)


class ReduceStatePallas:
    """Deterministic, synthetic-weight reimplementation of ReduceState."""

    def __init__(self, hidden_dim, trunc_norm_init_std=1e-4, key=None):
        if key is None:
            key = jax.random.PRNGKey(42)
        k1, k2, k3, k4 = jax.random.split(key, 4)
        self.hidden_dim = hidden_dim
        std = trunc_norm_init_std
        H = hidden_dim
        # nn.Linear(2H, H): weight (H, 2H), bias (H,)  -- PyTorch layout kept
        # as the "source of truth" params; kernel-ready forms precomputed once.
        self.w_h = std * jax.random.normal(k1, (H, 2 * H), jnp.float32)
        self.b_h = std * jax.random.normal(k2, (H,), jnp.float32)
        self.w_c = std * jax.random.normal(k3, (H, 2 * H), jnp.float32)
        self.b_c = std * jax.random.normal(k4, (H,), jnp.float32)
        # Precomputed kernel operands (hoisted out of the hot path):
        #   W^T has shape (2H, H); split the contraction dim into (2, H, H) so
        #   the kernel can consume the (2, B, H) LSTM state without a relayout.
        self.wt_h = self.w_h.T.reshape(2, H, H)
        self.wt_c = self.w_c.T.reshape(2, H, H)
        self.b_h2 = self.b_h.reshape(1, H)
        self.b_c2 = self.b_c.reshape(1, H)
        # TODO(synk): at production sizes (H >= 256) cast params/activations to
        # bf16 for the MXU on v6e/v7x and add K/B grid tiling for v7x's 64 MiB VMEM.

    def __call__(self, hidden):
        h, c = hidden                                  # each (2, B, H)
        H = self.hidden_dim
        slab = _reduce_state_fused(h, c, self.wt_h, self.b_h2,
                                   self.wt_c, self.b_c2)   # (B, 2H)
        red_h = slab[:, :H]
        red_c = slab[:, H:]
        return red_h[None, ...], red_c[None, ...]      # each (1, B, H)


if __name__ == "__main__":
    hidden_dim = 32
    batch = 8

    key = jax.random.PRNGKey(0)
    kh, kc = jax.random.split(key)
    h = jax.random.normal(kh, (2, batch, hidden_dim), jnp.float32)
    c = jax.random.normal(kc, (2, batch, hidden_dim), jnp.float32)

    module = ReduceStatePallas(hidden_dim=hidden_dim, trunc_norm_init_std=1e-4)
    out_h, out_c = module((h, c))
    jax.block_until_ready(out_h)
    jax.block_until_ready(out_c)

    # Reference check in plain JAX (same math as the PyTorch forward).
    h_in = jnp.transpose(h, (1, 0, 2)).reshape(batch, 2 * hidden_dim)
    c_in = jnp.transpose(c, (1, 0, 2)).reshape(batch, 2 * hidden_dim)
    ref_h = jnp.maximum(h_in @ module.w_h.T + module.b_h, 0.0)[None, ...]
    ref_c = jnp.maximum(c_in @ module.w_c.T + module.b_c, 0.0)[None, ...]

    assert out_h.shape == (1, batch, hidden_dim)
    assert out_c.shape == (1, batch, hidden_dim)
    assert jnp.allclose(out_h, ref_h, atol=1e-5, rtol=1e-5)
    assert jnp.allclose(out_c, ref_c, atol=1e-5, rtol=1e-5)

    print("KERNEL_OK")
</pallas_src>

<mosaic_0001>
module attributes {stable_mosaic.version = 11 : i64} {
  func.func @_reduce_state_kernel(%arg0: memref<2x8x32xf32, #tpu.memory_space<vmem>>, %arg1: memref<2x8x32xf32, #tpu.memory_space<vmem>>, %arg2: memref<2x32x32xf32, #tpu.memory_space<vmem>>, %arg3: memref<1x32xf32, #tpu.memory_space<vmem>>, %arg4: memref<2x32x32xf32, #tpu.memory_space<vmem>>, %arg5: memref<1x32xf32, #tpu.memory_space<vmem>>, %arg6: memref<8x64xf32, #tpu.memory_space<vmem>>) attributes {dimension_semantics = [], scalar_prefetch = 0 : i64, scratch_operands = 0 : i64, tpu.core_type = #tpu.core_type<tc>} {
    %c0 = arith.constant 0 : index
    %c0_0 = arith.constant 0 : index
    %c0_1 = arith.constant 0 : index
    %0 = vector.load %arg0[%c0, %c0_0, %c0_1] : memref<2x8x32xf32, #tpu.memory_space<vmem>>, vector<1x8x32xf32>
    %1 = vector.shape_cast %0 : vector<1x8x32xf32> to vector<8x32xf32>
    %c0_2 = arith.constant 0 : index
    %c0_3 = arith.constant 0 : index
    %c0_4 = arith.constant 0 : index
    %2 = vector.load %arg2[%c0_2, %c0_3, %c0_4] : memref<2x32x32xf32, #tpu.memory_space<vmem>>, vector<1x32x32xf32>
    %3 = vector.shape_cast %2 : vector<1x32x32xf32> to vector<32x32xf32>
    %cst = arith.constant dense<0.000000e+00> : vector<8x32xf32>
    %4 = tpu.matmul %1, %3, %cst {dimension_numbers = #tpu.dot_dimension_numbers<[1], [0], [0], [1], [0, 0, 1, 1], [], []>} : vector<8x32xf32>, vector<32x32xf32>, vector<8x32xf32> -> vector<8x32xf32>
    %c1 = arith.constant 1 : index
    %c0_5 = arith.constant 0 : index
    %c0_6 = arith.constant 0 : index
    %5 = vector.load %arg0[%c1, %c0_5, %c0_6] : memref<2x8x32xf32, #tpu.memory_space<vmem>>, vector<1x8x32xf32>
    %6 = vector.shape_cast %5 : vector<1x8x32xf32> to vector<8x32xf32>
    %c1_7 = arith.constant 1 : index
    %c0_8 = arith.constant 0 : index
    %c0_9 = arith.constant 0 : index
    %7 = vector.load %arg2[%c1_7, %c0_8, %c0_9] : memref<2x32x32xf32, #tpu.memory_space<vmem>>, vector<1x32x32xf32>
    %8 = vector.shape_cast %7 : vector<1x32x32xf32> to vector<32x32xf32>
    %cst_10 = arith.constant dense<0.000000e+00> : vector<8x32xf32>
    %9 = tpu.matmul %6, %8, %cst_10 {dimension_numbers = #tpu.dot_dimension_numbers<[1], [0], [0], [1], [0, 0, 1, 1], [], []>} : vector<8x32xf32>, vector<32x32xf32>, vector<8x32xf32> -> vector<8x32xf32>
    %10 = arith.addf %4, %9 : vector<8x32xf32>
    %c0_11 = arith.constant 0 : index
    %c0_12 = arith.constant 0 : index
    %11 = vector.load %arg3[%c0_11, %c0_12] : memref<1x32xf32, #tpu.memory_space<vmem>>, vector<1x32xf32>
    %12 = vector.broadcast %11 : vector<1x32xf32> to vector<8x32xf32>
    %13 = arith.addf %10, %12 : vector<8x32xf32>
    %cst_13 = arith.constant 0.000000e+00 : f32
    %14 = vector.broadcast %cst_13 : f32 to vector<8x32xf32>
    %15 = arith.maximumf %13, %14 : vector<8x32xf32>
    %c0_14 = arith.constant 0 : index
    %c0_15 = arith.constant 0 : index
    %c0_16 = arith.constant 0 : index
    %16 = vector.load %arg1[%c0_14, %c0_15, %c0_16] : memref<2x8x32xf32, #tpu.memory_space<vmem>>, vector<1x8x32xf32>
    %17 = vector.shape_cast %16 : vector<1x8x32xf32> to vector<8x32xf32>
    %c0_17 = arith.constant 0 : index
    %c0_18 = arith.constant 0 : index
    %c0_19 = arith.constant 0 : index
    %18 = vector.load %arg4[%c0_17, %c0_18, %c0_19] : memref<2x32x32xf32, #tpu.memory_space<vmem>>, vector<1x32x32xf32>
    %19 = vector.shape_cast %18 : vector<1x32x32xf32> to vector<32x32xf32>
    %cst_20 = arith.constant dense<0.000000e+00> : vector<8x32xf32>
    %20 = tpu.matmul %17, %19, %cst_20 {dimension_numbers = #tpu.dot_dimension_numbers<[1], [0], [0], [1], [0, 0, 1, 1], [], []>} : vector<8x32xf32>, vector<32x32xf32>, vector<8x32xf32> -> vector<8x32xf32>
    %c1_21 = arith.constant 1 : index
    %c0_22 = arith.constant 0 : index
    %c0_23 = arith.constant 0 : index
    %21 = vector.load %arg1[%c1_21, %c0_22, %c0_23] : memref<2x8x32xf32, #tpu.memory_space<vmem>>, vector<1x8x32xf32>
    %22 = vector.shape_cast %21 : vector<1x8x32xf32> to vector<8x32xf32>
    %c1_24 = arith.constant 1 : index
    %c0_25 = arith.constant 0 : index
    %c0_26 = arith.constant 0 : index
    %23 = vector.load %arg4[%c1_24, %c0_25, %c0_26] : memref<2x32x32xf32, #tpu.memory_space<vmem>>, vector<1x32x32xf32>
    %24 = vector.shape_cast %23 : vector<1x32x32xf32> to vector<32x32xf32>
    %cst_27 = arith.constant dense<0.000000e+00> : vector<8x32xf32>
    %25 = tpu.matmul %22, %24, %cst_27 {dimension_numbers = #tpu.dot_dimension_numbers<[1], [0], [0], [1], [0, 0, 1, 1], [], []>} : vector<8x32xf32>, vector<32x32xf32>, vector<8x32xf32> -> vector<8x32xf32>
    %26 = arith.addf %20, %25 : vector<8x32xf32>
    %c0_28 = arith.constant 0 : index
    %c0_29 = arith.constant 0 : index
    %27 = vector.load %arg5[%c0_28, %c0_29] : memref<1x32xf32, #tpu.memory_space<vmem>>, vector<1x32xf32>
    %28 = vector.broadcast %27 : vector<1x32xf32> to vector<8x32xf32>
    %29 = arith.addf %26, %28 : vector<8x32xf32>
    %cst_30 = arith.constant 0.000000e+00 : f32
    %30 = vector.broadcast %cst_30 : f32 to vector<8x32xf32>
    %31 = arith.maximumf %29, %30 : vector<8x32xf32>
    %32 = tpu.concatenate %15, %31 in 1 : vector<8x32xf32>, vector<8x32xf32> -> vector<8x64xf32>
    %c0_31 = arith.constant 0 : index
    %c0_32 = arith.constant 0 : index
    %33 = vector.load %arg6[%c0_31, %c0_32] : memref<8x64xf32, #tpu.memory_space<vmem>>, vector<8x64xf32>
    tpu.vector_store %arg6[%c0_31, %c0_32], %32 {strides = array<i32>} : memref<8x64xf32, #tpu.memory_space<vmem>>, vector<8x64xf32>,
    return
  }
}

</mosaic_0001>

<llo_original>
// kernel: tpu_custom_call.1
$region0: #{tpu_custom_call.1}
  #allocation0 [shape = 'u32[]', space=smem, size = 0x4, offset = 0x4, fixed_abs, tag = 'smem constant byte address 0x4 - core index']
  #allocation1 [shape = 'u32[72,128]{1,0:T(1,128)}', space=vmem, size = 0x9000, scoped, tag = 'internal scratch']
  %s0 = inlined_call_operand.hbm [shape: f32[2,8,32], index: 0, kind: input, shape index: {}]
  %s1 = inlined_call_operand.hbm [shape: f32[2,8,32], index: 1, kind: input, shape index: {}]
  %s2 = inlined_call_operand.hbm [shape: f32[2,32,32], index: 2, kind: input, shape index: {}]
  %s3 = inlined_call_operand.vmem [shape: f32[1,32], index: 3, kind: input, shape index: {}]
  %s4 = inlined_call_operand.hbm [shape: f32[2,32,32], index: 4, kind: input, shape index: {}]
  %s5 = inlined_call_operand.vmem [shape: f32[1,32], index: 5, kind: input, shape index: {}]
  %s6 = inlined_call_operand.hbm [shape: f32[8,64], index: 6, kind: output, shape index: {}]
  %s7 = sld [smem:[#allocation0]]
  $region50: #{tpu_custom_call.1} parent=0
    _
  %s9 = ssub.s32 1, %s7
  %s10 = scalar_select 0, %s9, %s7
  $region1: #{tpu_custom_call.1} parent=0
    #allocation2 [shape = 'u8[8192]{0}', space=vmem, size = 0x2000, scoped, tag = 'input window, operand 0, single buffered']
    #allocation3 [shape = 's32[1]{0}', space=sflag, size = 0x4, scoped, tag = 'scoped memory for tpu_custom_call.1']
    #allocation4 [shape = 's32[1]{0}', space=sflag, size = 0x4, scoped, tag = 'scoped memory for tpu_custom_call.1']
    #allocation5 [shape = 'u8[8192]{0}', space=vmem, size = 0x2000, scoped, tag = 'input window, operand 1, single buffered']
    #allocation6 [shape = 's32[1]{0}', space=sflag, size = 0x4, scoped, tag = 'scoped memory for tpu_custom_call.1']
    #allocation7 [shape = 'u8[32768]{0}', space=vmem, size = 0x8000, scoped, tag = 'input window, operand 2, single buffered']
    #allocation8 [shape = 'u8[32768]{0}', space=vmem, size = 0x8000, scoped, tag = 'input window, operand 4, single buffered']
    #allocation9 [shape = 's32[1]{0}', space=sflag, size = 0x4, scoped, tag = 'scoped memory for tpu_custom_call.1']
    #allocation10 [shape = 'u8[4096]{0}', space=vmem, size = 0x1000, scoped, tag = 'output window, operand 0, single buffered']
    %11 = vsyncpa [#allocation3], 0
    %12 = vsyncpa [#allocation6], 0
    %13 = vsyncpa [#allocation9], 0
    %14 = vsyncpa [#allocation4], 0
    // Predicated region
    $region2: #{tpu_custom_call.1} parent=1 // pred_check
      _
    $region3: #{tpu_custom_call.1} parent=1 // pred_check_branch
      %16 = sbr.rel (0) target = $region5
    $region4: #{tpu_custom_call.1} parent=1 // pred_region
      %18 = vsyncadd [#allocation3], 0
      %s19 = sshll.u32 %s0, 4
      %s20 = int_to_ptr.hbm [resolvable:$true] %s19
      %s21 = sshll.u32 [#allocation2], 4
      %s22 = int_to_ptr.vmem [resolvable:$true] %s21
      %27 = dma.hbm_to_vmem [thread:$0]  %s20, 256, %s22, [#allocation3], 128, 128, 8
    $region5: #{tpu_custom_call.1} parent=1 // pred_fallthru
      _
    // Predicated region
    $region6: #{tpu_custom_call.1} parent=1 // pred_check
      _
    $region7: #{tpu_custom_call.1} parent=1 // pred_check_branch
      %29 = sbr.rel (0) target = $region9
    $region8: #{tpu_custom_call.1} parent=1 // pred_region
      %31 = vsyncadd [#allocation6], 0
      %s32 = sshll.u32 %s1, 4
      %s33 = int_to_ptr.hbm [resolvable:$true] %s32
      %s34 = sshll.u32 [#allocation5], 4
      %s35 = int_to_ptr.vmem [resolvable:$true] %s34
      %40 = dma.hbm_to_vmem [thread:$0]  %s33, 256, %s35, [#allocation6], 128, 128, 8
    $region9: #{tpu_custom_call.1} parent=1 // pred_fallthru
      _
    // Predicated region
    $region10: #{tpu_custom_call.1} parent=1 // pred_check
      _
    $region11: #{tpu_custom_call.1} parent=1 // pred_check_branch
      %42 = sbr.rel (0) target = $region13
    $region12: #{tpu_custom_call.1} parent=1 // pred_region
      %44 = vsyncadd [#allocation6], 0
      %s45 = sshll.u32 %s2, 4
      %s46 = int_to_ptr.hbm [resolvable:$true] %s45
      %s47 = sshll.u32 [#allocation7], 4
      %s48 = int_to_ptr.vmem [resolvable:$true] %s47
      %53 = dma.hbm_to_vmem [thread:$0]  %s46, 1024, %s48, [#allocation6], 128, 128, 8
    $region13: #{tpu_custom_call.1} parent=1 // pred_fallthru
      _
    // Predicated region
    $region14: #{tpu_custom_call.1} parent=1 // pred_check
      _
    $region15: #{tpu_custom_call.1} parent=1 // pred_check_branch
      %55 = sbr.rel (0) target = $region17
    $region16: #{tpu_custom_call.1} parent=1 // pred_region
      _
    $region17: #{tpu_custom_call.1} parent=1 // pred_fallthru
      _
    // Predicated region
    $region18: #{tpu_custom_call.1} parent=1 // pred_check
      _
    $region19: #{tpu_custom_call.1} parent=1 // pred_check_branch
      %57 = sbr.rel (0) target = $region21
    $region20: #{tpu_custom_call.1} parent=1 // pred_region
      %59 = vsyncadd [#allocation9], 0
      %s60 = sshll.u32 %s4, 4
      %s61 = int_to_ptr.hbm [resolvable:$true] %s60
      %s62 = sshll.u32 [#allocation8], 4
      %s63 = int_to_ptr.vmem [resolvable:$true] %s62
      %68 = dma.hbm_to_vmem [thread:$0]  %s61, 1024, %s63, [#allocation9], 128, 128, 8
    $region21: #{tpu_custom_call.1} parent=1 // pred_fallthru
      _
    // Predicated region
    $region22: #{tpu_custom_call.1} parent=1 // pred_check
      _
    $region23: #{tpu_custom_call.1} parent=1 // pred_check_branch
      %70 = sbr.rel (0) target = $region25
    $region24: #{tpu_custom_call.1} parent=1 // pred_region
      _
    $region25: #{tpu_custom_call.1} parent=1 // pred_fallthru
      _
    // Predicated region
    $region26: #{tpu_custom_call.1} parent=1 // pred_check
      _
    $region27: #{tpu_custom_call.1} parent=1 // pred_check_branch
      %72 = sbr.rel (0) target = $region29
    $region28: #{tpu_custom_call.1} parent=1 // pred_region
      %74 = dma.done [#allocation3], 256
    $region29: #{tpu_custom_call.1} parent=1 // pred_fallthru
      _
    // Predicated region
    $region30: #{tpu_custom_call.1} parent=1 // pred_check
      _
    $region31: #{tpu_custom_call.1} parent=1 // pred_check_branch
      %76 = sbr.rel (0) target = $region33
    $region32: #{tpu_custom_call.1} parent=1 // pred_region
      %78 = dma.done [#allocation6], 256
    $region33: #{tpu_custom_call.1} parent=1 // pred_fallthru
      _
    // Predicated region
    $region34: #{tpu_custom_call.1} parent=1 // pred_check
      _
    $region35: #{tpu_custom_call.1} parent=1 // pred_check_branch
      %80 = sbr.rel (0) target = $region37
    $region36: #{tpu_custom_call.1} parent=1 // pred_region
      %82 = dma.done [#allocation6], 1024
    $region37: #{tpu_custom_call.1} parent=1 // pred_fallthru
      _
    // Predicated region
    $region38: #{tpu_custom_call.1} parent=1 // pred_check
      _
    $region39: #{tpu_custom_call.1} parent=1 // pred_check_branch
      %84 = sbr.rel (0) target = $region41
    $region40: #{tpu_custom_call.1} parent=1 // pred_region
      %86 = dma.done [#allocation9], 1024
    $region41: #{tpu_custom_call.1} parent=1 // pred_fallthru
      _
    %v87 = vld [vmem:[#allocation2] sm:$0xff]
    %v88 = vld [vmem:[#allocation7] sm:$0xff]
    %v89 = vld [vmem:[#allocation7 + $0x8] sm:$0xff]
    %v90 = vld [vmem:[#allocation7 + $0x10] sm:$0xff]
    %v91 = vld [vmem:[#allocation7 + $0x18] sm:$0xff]
    %s92 = scalar_lea.vmem [#allocation2], 8
    %v93 = vld [vmem:[%s92] sm:$0xff]
    %s94 = scalar_lea.vmem [#allocation7], 32
    %v95 = vld [vmem:[%s94] sm:$0xff]
    %v96 = vld [vmem:[%s94 + $0x8] sm:$0xff]
    %v97 = vld [vmem:[%s94 + $0x10] sm:$0xff]
    %v98 = vld [vmem:[%s94 + $0x18] sm:$0xff]
    %vm99 = vcmask 261120
    %v101 = vsel %vm99, %v93, 0
    %103 = vmatpush.msra.mxu0 0.0
    %104 = vmatpush.msra.mxu0 0.0
    %105 = vmatpush.msra.mxu0 0.0
    %106 = vmatpush.msra.mxu0 0.0
    %107 = vmatpush.msra.mxu0 0.0
    %108 = vmatpush.msra.mxu0 0.0
    %109 = vmatpush.msra.mxu0 0.0
    %110 = vmatpush.msra.mxu0 0.0
    %111 = vmatpush.msra.mxu0 0.0
    %112 = vmatpush.msra.mxu0 0.0
    %113 = vmatpush.msra.mxu0 0.0
    %114 = vmatpush.msra.mxu0 0.0
    %115 = vmatpush.msra.mxu0 %v98
    %116 = vmatpush.msra.mxu0 %v97
    %117 = vmatpush.msra.mxu0 %v96
    %118 = vmatpush.msra.mxu0 %v95
    %119 = vmatmul.f32.gmra.mxu0 %v101
    %v120 = vpop.f32.mrf.mxu0
    %v121 = vadd.f32 0.0, %v120
    %122 = vdwg.mxu0
    %v124 = vsel %vm99, %v87, 0
    %126 = vmatpush.msra.mxu0 0.0
    %127 = vmatpush.msra.mxu0 0.0
    %128 = vmatpush.msra.mxu0 0.0
    %129 = vmatpush.msra.mxu0 0.0
    %130 = vmatpush.msra.mxu0 0.0
    %131 = vmatpush.msra.mxu0 0.0
    %132 = vmatpush.msra.mxu0 0.0
    %133 = vmatpush.msra.mxu0 0.0
    %134 = vmatpush.msra.mxu0 0.0
    %135 = vmatpush.msra.mxu0 0.0
    %136 = vmatpush.msra.mxu0 0.0
    %137 = vmatpush.msra.mxu0 0.0
    %138 = vmatpush.msra.mxu0 %v91
    %139 = vmatpush.msra.mxu0 %v90
    %140 = vmatpush.msra.mxu0 %v89
    %141 = vmatpush.msra.mxu0 %v88
    %142 = vmatmul.f32.gmra.mxu0 %v124
    %v143 = vpop.f32.mrf.mxu0
    %v144 = vadd.f32 %v121, %v143
    %145 = vdwg.mxu0
    %v146 = vld [vmem:[%s3] sm:$0x1]
    %v148 = vperm.slane %v146, 0
    %v150 = vadd.f32 %v144, %v148
    %v151 = vmax.f32 %v150, 0.0
    %v152 = vld [vmem:[#allocation5] sm:$0xff]
    %v153 = vld [vmem:[#allocation8] sm:$0xff]
    %v154 = vld [vmem:[#allocation8 + $0x8] sm:$0xff]
    %v155 = vld [vmem:[#allocation8 + $0x10] sm:$0xff]
    %v156 = vld [vmem:[#allocation8 + $0x18] sm:$0xff]
    %s157 = scalar_lea.vmem [#allocation5], 8
    %v158 = vld [vmem:[%s157] sm:$0xff]
    %s159 = scalar_lea.vmem [#allocation8], 32
    %v160 = vld [vmem:[%s159] sm:$0xff]
    %v161 = vld [vmem:[%s159 + $0x8] sm:$0xff]
    %v162 = vld [vmem:[%s159 + $0x10] sm:$0xff]
    %v163 = vld [vmem:[%s159 + $0x18] sm:$0xff]
    %v165 = vsel %vm99, %v158, 0
    %167 = vmatpush.msra.mxu0 0.0
    %168 = vmatpush.msra.mxu0 0.0
    %169 = vmatpush.msra.mxu0 0.0
    %170 = vmatpush.msra.mxu0 0.0
    %171 = vmatpush.msra.mxu0 0.0
    %172 = vmatpush.msra.mxu0 0.0
    %173 = vmatpush.msra.mxu0 0.0
    %174 = vmatpush.msra.mxu0 0.0
    %175 = vmatpush.msra.mxu0 0.0
    %176 = vmatpush.msra.mxu0 0.0
    %177 = vmatpush.msra.mxu0 0.0
    %178 = vmatpush.msra.mxu0 0.0
    %179 = vmatpush.msra.mxu0 %v163
    %180 = vmatpush.msra.mxu0 %v162
    %181 = vmatpush.msra.mxu0 %v161
    %182 = vmatpush.msra.mxu0 %v160
    %183 = vmatmul.f32.gmra.mxu0 %v165
    %v184 = vpop.f32.mrf.mxu0
    %v185 = vadd.f32 0.0, %v184
    %186 = vdwg.mxu0
    %v188 = vsel %vm99, %v152, 0
    %190 = vmatpush.msra.mxu0 0.0
    %191 = vmatpush.msra.mxu0 0.0
    %192 = vmatpush.msra.mxu0 0.0
    %193 = vmatpush.msra.mxu0 0.0
    %194 = vmatpush.msra.mxu0 0.0
    %195 = vmatpush.msra.mxu0 0.0
    %196 = vmatpush.msra.mxu0 0.0
    %197 = vmatpush.msra.mxu0 0.0
    %198 = vmatpush.msra.mxu0 0.0
    %199 = vmatpush.msra.mxu0 0.0
    %200 = vmatpush.msra.mxu0 0.0
    %201 = vmatpush.msra.mxu0 0.0
    %202 = vmatpush.msra.mxu0 %v156
    %203 = vmatpush.msra.mxu0 %v155
    %204 = vmatpush.msra.mxu0 %v154
    %205 = vmatpush.msra.mxu0 %v153
    %206 = vmatmul.f32.gmra.mxu0 %v188
    %v207 = vpop.f32.mrf.mxu0
    %v208 = vadd.f32 %v185, %v207
    %209 = vdwg.mxu0
    %v210 = vld [vmem:[%s5] sm:$0x1]
    %v212 = vperm.slane %v210, 0
    %v214 = vadd.f32 %v208, %v212
    %v215 = vmax.f32 %v214, 0.0
    %217 = vrot.lane.b32.xlu0 %v215, 32
    %v218 = vpop.permute.xlu0 %217
    %v220 = vsel %vm99, %v151, %v218
    %vm221 = vcmask 523264
    %222 = vst.msk [vmem:[#allocation10] sm:$0xff] %vm221, %v220
    // Predicated region
    $region42: #{tpu_custom_call.1} parent=1 // pred_check
      _
    $region43: #{tpu_custom_call.1} parent=1 // pred_check_branch
      %224 = sbr.rel (0) target = $region45
    $region44: #{tpu_custom_call.1} parent=1 // pred_region
      %226 = vsyncadd [#allocation4], 0
      %s228 = sshll.u32 [#allocation10], 4
      %s229 = int_to_ptr.vmem [resolvable:$true] %s228
      %s230 = sshll.u32 %s6, 4
      %s231 = int_to_ptr.hbm [resolvable:$true] %s230
      %233 = dma.vmem_to_hbm [thread:$0]  %s229, 128, %s231, [#allocation4]
    $region45: #{tpu_custom_call.1} parent=1 // pred_fallthru
      _
    // Predicated region
    $region46: #{tpu_custom_call.1} parent=1 // pred_check
      _
    $region47: #{tpu_custom_call.1} parent=1 // pred_check_branch
      %235 = sbr.rel (0) target = $region49
    $region48: #{tpu_custom_call.1} parent=1 // pred_region
      %237 = dma.done [#allocation4], 128
    $region49: #{tpu_custom_call.1} parent=1 // pred_fallthru
      _
    %238 = vsyncpa [#allocation3], 1
    %239 = vsyncpa [#allocation6], 1
    %240 = vsyncpa [#allocation9], 1
    %241 = vsyncpa [#allocation4], 1

</llo_original>
